<compile_context>
chip_gen: v6e
topology: v6e:2x2x1
jax: 0.10.0
libtpu: 0.0.40
codegen_flags: <defaults>
</compile_context>

<pallas_src>
import functools

import jax
import jax.numpy as jnp
from jax.experimental import pallas as pl
from jax.experimental.pallas import tpu as pltpu

_EPS = 1e-12           # matches F.normalize default eps
_EPS_SQ = _EPS * _EPS  # clamp on sum-of-squares == max(sqrt(ss), eps)


# ----------------------------- RMSNorm kernel -------------------------------
def _rmsnorm_kernel(x_ref, w_ref, o_ref, *, k, dim):
    """x_ref: (block_rows, k*dim) -- k logical rows packed per lane-dense row.
       w_ref: (1, k*dim)          -- gamma * sqrt(dim), tiled k times, float32.
    """
    x = x_ref[...].astype(jnp.float32)
    w = w_ref[...]
    if k == 1:
        ss = jnp.sum(x * x, axis=-1, keepdims=True)            # (B, 1)
        inv = jax.lax.rsqrt(jnp.maximum(ss, _EPS_SQ))           # one rsqrt per row
        y = (x * inv) * w
    else:
        pieces = []
        for g in range(k):                                      # static unroll, k small
            xg = x[:, g * dim:(g + 1) * dim]                    # (B, dim)
            ss = jnp.sum(xg * xg, axis=-1, keepdims=True)       # (B, 1)
            inv = jax.lax.rsqrt(jnp.maximum(ss, _EPS_SQ))
            pieces.append(xg * inv)
        y = jnp.concatenate(pieces, axis=-1) * w                # (B, k*dim), lane-dense
    o_ref[...] = y.astype(o_ref.dtype)


def rmsnorm(x, gamma, *, target_tile_bytes=2 << 20):
    """x: (..., dim), gamma: (dim,). Returns same shape/dtype as x."""
    orig_shape = x.shape
    dim = int(orig_shape[-1])
    rows = 1
    for s in orig_shape[:-1]:
        rows *= int(s)

    # Lane-dense packing for narrow dims.
    if dim < 128 and 128 % dim == 0:
        k = 128 // dim
    else:
        k = 1
    width = k * dim
    itemsize = jnp.dtype(x.dtype).itemsize

    bytes_per_row = width * itemsize
    block_rows = int(target_tile_bytes // bytes_per_row)
    block_rows = max(32, min(block_rows, 8192))
    block_rows -= block_rows % 32

    rows_packed = -(-rows // k)
    if block_rows >= rows_packed:
        block_rows = -(-rows_packed // 8) * 8        # one full-extent tile

    chunk = k * block_rows
    rows_pad = -(-rows // chunk) * chunk

    x2 = x.reshape(rows, dim)
    if rows_pad != rows:
        # Zero rows normalize to zero and are sliced off afterwards.
        x2 = jnp.pad(x2, ((0, rows_pad - rows), (0, 0)))
    xp = x2.reshape(rows_pad // k, width)            # contiguous reshape: free in HBM

    scale = float(dim) ** 0.5
    w = (gamma.astype(jnp.float32) * scale).reshape(1, dim)
    if k > 1:
        w = jnp.tile(w, (1, k))

    n_tiles = (rows_pad // k) // block_rows
    kernel = functools.partial(_rmsnorm_kernel, k=k, dim=dim)

    cost = pl.CostEstimate(
        flops=3 * rows * dim,
        transcendentals=rows,
        bytes_accessed=2 * rows * dim * itemsize + dim * 4,
    )

    out = pl.pallas_call(
        kernel,
        out_shape=jax.ShapeDtypeStruct((rows_pad // k, width), x.dtype),
        grid_spec=pltpu.PrefetchScalarGridSpec(
            num_scalar_prefetch=0,
            grid=(n_tiles,),
            in_specs=[
                pl.BlockSpec((block_rows, width), lambda i: (i, 0)),
                pl.BlockSpec((1, width), lambda i: (0, 0)),
            ],
            out_specs=pl.BlockSpec((block_rows, width), lambda i: (i, 0)),
        ),
        compiler_params=pltpu.CompilerParams(
            dimension_semantics=("parallel",),
        ),
        cost_estimate=cost,
    )(xp, w)

    out = out.reshape(rows_pad, dim)[:rows]
    return out.reshape(orig_shape)


# --------------------- masked cross-entropy segment loss --------------------
def _masked_ce_kernel(logits_ref, labels_ref, loss_ref, cnt_ref,
                      acc_loss, acc_cnt, *, ignore_index):
    i = pl.program_id(0)

    @pl.when(i == 0)
    def _():
        acc_loss[...] = jnp.zeros_like(acc_loss)
        acc_cnt[...] = jnp.zeros_like(acc_cnt)

    x = logits_ref[...].astype(jnp.float32)                     # (B, C)
    lbl = labels_ref[...]                                       # (B, 1) int32
    m = jnp.max(x, axis=-1, keepdims=True)
    lse = jnp.log(jnp.sum(jnp.exp(x - m), axis=-1, keepdims=True)) + m   # (B, 1)
    col = jax.lax.broadcasted_iota(jnp.int32, x.shape, 1)
    picked = jnp.sum(jnp.where(col == lbl, x, 0.0), axis=-1, keepdims=True)  # (B, 1)
    valid = lbl != ignore_index                                 # (B, 1) bool
    loss = jnp.where(valid, lse - picked, 0.0)

    acc_loss[...] += jnp.sum(loss, keepdims=True)
    acc_cnt[...] += jnp.sum(valid.astype(jnp.float32), keepdims=True)

    @pl.when(i == pl.num_programs(0) - 1)
    def _():
        loss_ref[...] = acc_loss[...]
        cnt_ref[...] = acc_cnt[...]


def masked_ce_sums(logits, labels, *, ignore_index=-1, target_tile_bytes=2 << 20):
    """logits: (..., C), labels: (...). Returns (sum of CE loss over non-ignored
    tokens, number of non-ignored tokens) as float32 scalars."""
    C = int(logits.shape[-1])
    rows = 1
    for s in logits.shape[:-1]:
        rows *= int(s)
    x = logits.reshape(rows, C)
    lbl = labels.reshape(rows, 1).astype(jnp.int32)

    itemsize = jnp.dtype(logits.dtype).itemsize
    block_rows = int(target_tile_bytes // (C * itemsize))
    block_rows = max(8, min(block_rows, 4096))
    block_rows -= block_rows % 8
    if block_rows >= rows:
        block_rows = -(-rows // 8) * 8
    rows_pad = -(-rows // block_rows) * block_rows
    if rows_pad != rows:
        # Padded rows get label == ignore_index -> contribute nothing.
        x = jnp.pad(x, ((0, rows_pad - rows), (0, 0)))
        lbl = jnp.pad(lbl, ((0, rows_pad - rows), (0, 0)),
                      constant_values=ignore_index)
    n_tiles = rows_pad // block_rows

    kernel = functools.partial(_masked_ce_kernel, ignore_index=ignore_index)
    cost = pl.CostEstimate(
        flops=5 * rows * C,
        transcendentals=rows * C + rows,
        bytes_accessed=rows * C * itemsize + rows * 4 + 8,
    )

    loss_sum, cnt = pl.pallas_call(
        kernel,
        out_shape=(jax.ShapeDtypeStruct((1, 1), jnp.float32),
                   jax.ShapeDtypeStruct((1, 1), jnp.float32)),
        grid_spec=pltpu.PrefetchScalarGridSpec(
            num_scalar_prefetch=0,
            grid=(n_tiles,),
            in_specs=[
                pl.BlockSpec((block_rows, C), lambda i: (i, 0)),
                pl.BlockSpec((block_rows, 1), lambda i: (i, 0)),
            ],
            out_specs=[
                pl.BlockSpec((1, 1), lambda i: (0, 0)),
                pl.BlockSpec((1, 1), lambda i: (0, 0)),
            ],
            scratch_shapes=[pltpu.VMEM((1, 1), jnp.float32),
                            pltpu.VMEM((1, 1), jnp.float32)],
        ),
        compiler_params=pltpu.CompilerParams(
            dimension_semantics=("arbitrary",),
        ),
        cost_estimate=cost,
    )(x, lbl)
    return loss_sum[0, 0], cnt[0, 0]


# -------------------- wrapper forward (loss accumulation) -------------------
def infini_wrapper_forward(seq, model_fn, *, segment_length, ignore_index=-1):
    """InfiniTransformerWrapper.forward loss semantics: shift seq into (input,
    label), split into segments, per segment compute masked CE, scale by
    frac_tokens and accumulate."""
    inp, label = seq[:, :-1], seq[:, 1:]
    total_tokens = jnp.sum((label != ignore_index).astype(jnp.float32))
    n = inp.shape[1]
    total_loss = jnp.float32(0.0)
    # TODO(synk): past_memories carry / detach scheduling and backward() of the
    # real InfiniTransformer are training-loop orchestration, not implemented.
    for start in range(0, n, segment_length):
        seg_in = inp[:, start:start + segment_length]
        seg_lbl = label[:, start:start + segment_length]
        logits = model_fn(seg_in)                                    # (B, n_seg, C)
        loss_sum, cnt = masked_ce_sums(logits, seg_lbl, ignore_index=ignore_index)
        frac = cnt / total_tokens
        seg_scaled = jnp.where(cnt > 0,
                               (loss_sum / jnp.maximum(cnt, 1.0)) * frac, 0.0)
        total_loss = total_loss + seg_scaled
    return total_loss


def make_standin_model(embed, gamma, w_out):
    """Minimal deterministic stand-in for InfiniTransformer:
    token embedding -> RMSNorm (Pallas) -> vocab projection."""
    def model_fn(tokens):
        h = jnp.take(embed, tokens, axis=0)          # (B, n, dim)
        h = rmsnorm(h, gamma)                        # Pallas kernel
        return jnp.einsum('bnd,dc->bnc', h.astype(jnp.float32), w_out)
    return model_fn


# --------------------------------- references --------------------------------
def rmsnorm_reference(x, gamma):
    xf = x.astype(jnp.float32)
    norm = jnp.sqrt(jnp.sum(xf * xf, axis=-1, keepdims=True))
    norm = jnp.maximum(norm, 1e-12)
    dim = x.shape[-1]
    return ((xf / norm) * (dim ** 0.5) * gamma.astype(jnp.float32)).astype(x.dtype)


def masked_ce_reference(logits, labels, ignore_index=-1):
    x = logits.astype(jnp.float32)
    lse = jax.scipy.special.logsumexp(x, axis=-1)
    picked = jnp.take_along_axis(x, jnp.maximum(labels, 0)[..., None], axis=-1)[..., 0]
    mask = labels != ignore_index
    loss = jnp.where(mask, lse - picked, 0.0)
    return jnp.sum(loss), jnp.sum(mask.astype(jnp.float32))


def infini_wrapper_forward_reference(seq, embed, gamma, w_out, *,
                                     segment_length, ignore_index=-1):
    inp, label = seq[:, :-1], seq[:, 1:]
    total_tokens = jnp.sum((label != ignore_index).astype(jnp.float32))
    n = inp.shape[1]
    total_loss = jnp.float32(0.0)
    for start in range(0, n, segment_length):
        seg_in = inp[:, start:start + segment_length]
        seg_lbl = label[:, start:start + segment_length]
        h = rmsnorm_reference(jnp.take(embed, seg_in, axis=0), gamma)
        logits = jnp.einsum('bnd,dc->bnc', h.astype(jnp.float32), w_out)
        loss_sum, cnt = masked_ce_reference(logits, seg_lbl, ignore_index)
        total_loss = total_loss + jnp.where(
            cnt > 0, (loss_sum / jnp.maximum(cnt, 1.0)) * (cnt / total_tokens), 0.0)
    return total_loss


if __name__ == "__main__":
    key = jax.random.PRNGKey(0)
    k_seq, k_emb, k_out, k_g, k_x = jax.random.split(key, 5)

    batch, total_len, segment_length = 2, 17, 8        # -> 16 label tokens, 2 segments
    vocab, dim = 256, 32

    seq = jax.random.randint(k_seq, (batch, total_len), 0, vocab, dtype=jnp.int32)
    seq = seq.at[0, -1].set(-1)                         # one ignore_index label
    embed = 0.02 * jax.random.normal(k_emb, (vocab, dim), jnp.float32)
    w_out = 0.02 * jax.random.normal(k_out, (dim, vocab), jnp.float32)
    gamma = jnp.ones((dim,), jnp.float32) + 0.1 * jax.random.normal(k_g, (dim,), jnp.float32)

    # 1) RMSNorm kernel (dim=32 -> lane-packed k=4 path).
    x = jax.random.normal(k_x, (batch, 8, dim), jnp.float32)
    y = jax.block_until_ready(rmsnorm(x, gamma))
    assert y.shape == x.shape and y.dtype == x.dtype
    assert jnp.allclose(y, rmsnorm_reference(x, gamma), atol=1e-5, rtol=1e-5), "rmsnorm dim=32"

    # RMSNorm k=1 path with non-divisible row count (padding path).
    x2 = jax.random.normal(jax.random.PRNGKey(1), (3, 17, 128), jnp.float32)
    g2 = jax.random.normal(jax.random.PRNGKey(2), (128,), jnp.float32)
    y2 = jax.block_until_ready(rmsnorm(x2, g2))
    assert jnp.allclose(y2, rmsnorm_reference(x2, g2), atol=1e-5, rtol=1e-5), "rmsnorm dim=128"

    # 2) Masked cross-entropy kernel.
    logits = jax.random.normal(jax.random.PRNGKey(3), (batch, segment_length, vocab), jnp.float32)
    lbls = jax.random.randint(jax.random.PRNGKey(4), (batch, segment_length), 0, vocab,
                              dtype=jnp.int32)
    lbls = lbls.at[1, 0].set(-1)
    ls, ct = jax.block_until_ready(masked_ce_sums(logits, lbls, ignore_index=-1))
    ls_ref, ct_ref = masked_ce_reference(logits, lbls, -1)
    assert jnp.allclose(ls, ls_ref, atol=1e-3, rtol=1e-5), "masked CE loss sum"
    assert jnp.allclose(ct, ct_ref), "masked CE token count"

    # 3) Wrapper forward: segmented, token-fraction-weighted loss accumulation.
    model_fn = make_standin_model(embed, gamma, w_out)
    loss = jax.block_until_ready(
        infini_wrapper_forward(seq, model_fn, segment_length=segment_length, ignore_index=-1))
    loss_ref = infini_wrapper_forward_reference(
        seq, embed, gamma, w_out, segment_length=segment_length, ignore_index=-1)
    assert jnp.allclose(loss, loss_ref, atol=1e-4, rtol=1e-4), "wrapper forward loss"

    print("KERNEL_OK")
</pallas_src>

<mosaic_0001>
module attributes {stable_mosaic.version = 11 : i64} {
  func.func @_rmsnorm_kernel(%arg0: i32, %arg1: memref<8x128xf32, #tpu.memory_space<vmem>>, %arg2: memref<1x128xf32, #tpu.memory_space<vmem>>, %arg3: memref<8x128xf32, #tpu.memory_space<vmem>>) attributes {dimension_semantics = [#tpu.dimension_semantics<parallel>], iteration_bounds = array<i64: 1>, scalar_prefetch = 0 : i64, scratch_operands = 0 : i64, tpu.core_type = #tpu.core_type<tc>, window_params = [{transform_indices = @transform_0, window_bounds = array<i64: 8, 128>}, {pipeline_mode = #tpu.pipeline_mode<synchronous>, transform_indices = @transform_1, window_bounds = array<i64: 1, 128>}, {transform_indices = @transform_2, window_bounds = array<i64: 8, 128>}]} {
    %c0 = arith.constant 0 : index
    %c0_0 = arith.constant 0 : index
    %0 = vector.load %arg1[%c0, %c0_0] : memref<8x128xf32, #tpu.memory_space<vmem>>, vector<8x128xf32>
    %c0_1 = arith.constant 0 : index
    %c0_2 = arith.constant 0 : index
    %1 = vector.load %arg2[%c0_1, %c0_2] : memref<1x128xf32, #tpu.memory_space<vmem>>, vector<1x128xf32>
    %2 = vector.extract_strided_slice %0 {offsets = [0, 0], sizes = [8, 32], strides = [1, 1]} : vector<8x128xf32> to vector<8x32xf32>
    %3 = arith.mulf %2, %2 : vector<8x32xf32>
    %cst = arith.constant dense<0.000000e+00> : vector<8xf32>
    %4 = vector.multi_reduction <add>, %3, %cst [1] : vector<8x32xf32> to vector<8xf32>
    %5 = vector.shape_cast %4 : vector<8xf32> to vector<8x1xf32>
    %cst_3 = arith.constant 1.000000e-24 : f32
    %6 = vector.broadcast %cst_3 : f32 to vector<8x1xf32>
    %7 = arith.maximumf %5, %6 : vector<8x1xf32>
    %8 = math.rsqrt %7 : vector<8x1xf32>
    %9 = vector.broadcast %8 : vector<8x1xf32> to vector<8x32xf32>
    %10 = arith.mulf %2, %9 : vector<8x32xf32>
    %11 = vector.extract_strided_slice %0 {offsets = [0, 32], sizes = [8, 32], strides = [1, 1]} : vector<8x128xf32> to vector<8x32xf32>
    %12 = arith.mulf %11, %11 : vector<8x32xf32>
    %cst_4 = arith.constant dense<0.000000e+00> : vector<8xf32>
    %13 = vector.multi_reduction <add>, %12, %cst_4 [1] : vector<8x32xf32> to vector<8xf32>
    %14 = vector.shape_cast %13 : vector<8xf32> to vector<8x1xf32>
    %cst_5 = arith.constant 1.000000e-24 : f32
    %15 = vector.broadcast %cst_5 : f32 to vector<8x1xf32>
    %16 = arith.maximumf %14, %15 : vector<8x1xf32>
    %17 = math.rsqrt %16 : vector<8x1xf32>
    %18 = vector.broadcast %17 : vector<8x1xf32> to vector<8x32xf32>
    %19 = arith.mulf %11, %18 : vector<8x32xf32>
    %20 = vector.extract_strided_slice %0 {offsets = [0, 64], sizes = [8, 32], strides = [1, 1]} : vector<8x128xf32> to vector<8x32xf32>
    %21 = arith.mulf %20, %20 : vector<8x32xf32>
    %cst_6 = arith.constant dense<0.000000e+00> : vector<8xf32>
    %22 = vector.multi_reduction <add>, %21, %cst_6 [1] : vector<8x32xf32> to vector<8xf32>
    %23 = vector.shape_cast %22 : vector<8xf32> to vector<8x1xf32>
    %cst_7 = arith.constant 1.000000e-24 : f32
    %24 = vector.broadcast %cst_7 : f32 to vector<8x1xf32>
    %25 = arith.maximumf %23, %24 : vector<8x1xf32>
    %26 = math.rsqrt %25 : vector<8x1xf32>
    %27 = vector.broadcast %26 : vector<8x1xf32> to vector<8x32xf32>
    %28 = arith.mulf %20, %27 : vector<8x32xf32>
    %29 = vector.extract_strided_slice %0 {offsets = [0, 96], sizes = [8, 32], strides = [1, 1]} : vector<8x128xf32> to vector<8x32xf32>
    %30 = arith.mulf %29, %29 : vector<8x32xf32>
    %cst_8 = arith.constant dense<0.000000e+00> : vector<8xf32>
    %31 = vector.multi_reduction <add>, %30, %cst_8 [1] : vector<8x32xf32> to vector<8xf32>
    %32 = vector.shape_cast %31 : vector<8xf32> to vector<8x1xf32>
    %cst_9 = arith.constant 1.000000e-24 : f32
    %33 = vector.broadcast %cst_9 : f32 to vector<8x1xf32>
    %34 = arith.maximumf %32, %33 : vector<8x1xf32>
    %35 = math.rsqrt %34 : vector<8x1xf32>
    %36 = vector.broadcast %35 : vector<8x1xf32> to vector<8x32xf32>
    %37 = arith.mulf %29, %36 : vector<8x32xf32>
    %38 = tpu.concatenate %10, %19, %28, %37 in 1 : vector<8x32xf32>, vector<8x32xf32>, vector<8x32xf32>, vector<8x32xf32> -> vector<8x128xf32>
    %39 = vector.broadcast %1 : vector<1x128xf32> to vector<8x128xf32>
    %40 = arith.mulf %38, %39 : vector<8x128xf32>
    %c0_10 = arith.constant 0 : index
    %c0_11 = arith.constant 0 : index
    %41 = vector.load %arg3[%c0_10, %c0_11] : memref<8x128xf32, #tpu.memory_space<vmem>>, vector<8x128xf32>
    tpu.vector_store %arg3[%c0_10, %c0_11], %40 {strides = array<i32>} : memref<8x128xf32, #tpu.memory_space<vmem>>, vector<8x128xf32>,
    return
  }
  func.func @transform_0(%arg0: i32) -> (i32, i32) {
    %c0_i32 = arith.constant 0 : i32
    %c0_i32_0 = arith.constant 0 : i32
    return %arg0, %c0_i32 : i32, i32
  }
  func.func @transform_1(%arg0: i32) -> (i32, i32) {
    %c0_i32 = arith.constant 0 : i32
    %c0_i32_0 = arith.constant 0 : i32
    %c0_i32_1 = arith.constant 0 : i32
    return %c0_i32, %c0_i32_0 : i32, i32
  }
  func.func @transform_2(%arg0: i32) -> (i32, i32) {
    %c0_i32 = arith.constant 0 : i32
    %c0_i32_0 = arith.constant 0 : i32
    return %arg0, %c0_i32 : i32, i32
  }
}

</mosaic_0001>

<llo_original>
// kernel: tpu_custom_call.1
$region0: #{tpu_custom_call.1}
  #allocation0 [shape = 'u32[]', space=smem, size = 0x4, offset = 0x4, fixed_abs, tag = 'smem constant byte address 0x4 - core index']
  #allocation1 [shape = 'u32[144,128]{1,0:T(1,128)}', space=vmem, size = 0x12000, scoped, tag = 'internal scratch']
  %s0 = inlined_call_operand.hbm [shape: f32[8,128], index: 0, kind: input, shape index: {}]
  %s1 = inlined_call_operand.vmem [shape: f32[1,128], index: 1, kind: input, shape index: {}]
  %s2 = inlined_call_operand.hbm [shape: f32[8,128], index: 2, kind: output, shape index: {}]
  %s3 = sld [smem:[#allocation0]]
  $region22: #{tpu_custom_call.1} parent=0
    _
  %s5 = ssub.s32 1, %s3
  %s6 = scalar_select 0, %s5, %s3
  $region1: #{tpu_custom_call.1} parent=0
    #allocation2 [shape = 'u8[4096]{0}', space=vmem, size = 0x1000, scoped, tag = 'input window, operand 0, single buffered']
    #allocation3 [shape = 's32[1]{0}', space=sflag, size = 0x4, scoped, tag = 'scoped memory for tpu_custom_call.1']
    #allocation4 [shape = 's32[1]{0}', space=sflag, size = 0x4, scoped, tag = 'scoped memory for tpu_custom_call.1']
    #allocation5 [shape = 'u8[4096]{0}', space=vmem, size = 0x1000, scoped, tag = 'output window, operand 0, single buffered']
    %7 = vsyncpa [#allocation3], 0
    %8 = vsyncpa [#allocation4], 0
    // Predicated region
    $region2: #{tpu_custom_call.1} parent=1 // pred_check
      _
    $region3: #{tpu_custom_call.1} parent=1 // pred_check_branch
      %10 = sbr.rel (0) target = $region5
    $region4: #{tpu_custom_call.1} parent=1 // pred_region
      %s12 = ssub.s32 128, 128
      %13 = vsyncadd [#allocation3], %s12
      %s15 = sshll.u32 [#allocation2], 4
      %s16 = int_to_ptr.vmem [resolvable:$true] %s15
      %18 = dma.hbm_to_vmem [thread:$0]  %s0, 128, %s16, [#allocation3]
    $region5: #{tpu_custom_call.1} parent=1 // pred_fallthru
      _
    // Predicated region
    $region6: #{tpu_custom_call.1} parent=1 // pred_check
      _
    $region7: #{tpu_custom_call.1} parent=1 // pred_check_branch
      %20 = sbr.rel (0) target = $region9
    $region8: #{tpu_custom_call.1} parent=1 // pred_region
      _
    $region9: #{tpu_custom_call.1} parent=1 // pred_fallthru
      _
    // Predicated region
    $region10: #{tpu_custom_call.1} parent=1 // pred_check
      _
    $region11: #{tpu_custom_call.1} parent=1 // pred_check_branch
      %22 = sbr.rel (0) target = $region13
    $region12: #{tpu_custom_call.1} parent=1 // pred_region
      %23 = dma.done [#allocation3], 128
    $region13: #{tpu_custom_call.1} parent=1 // pred_fallthru
      _
    %v24 = vld [vmem:[#allocation2] sm:$0xff]
    %v25 = vld [vmem:[%s1] sm:$0x1]
    %v26 = vmul.f32 %v24, %v24
    %vm27 = vcmask 261120
    %v28 = vsel %vm27, %v26, 0.0
    %29 = vadd.xlane.f32.xlu0 %v28
    %v30 = vpop.xlane.xlu0 %29
    %v31 = vmax.f32 %v30, 1e-24
    %v32 = vrsqrt.pop %v31
    %v33 = vmul.f32 %v24, %v32
    %35 = vrot.lane.b32.xlu0 %v26, 96
    %v36 = vpop.permute.xlu0 %35
    %v38 = vsel %vm27, %v36, 0.0
    %39 = vadd.xlane.f32.xlu0 %v38
    %v40 = vpop.xlane.xlu0 %39
    %v41 = vmax.f32 %v40, 1e-24
    %v42 = vrsqrt.pop %v41
    %v43 = vmul.f32 %v24, %v42
    %44 = vrot.lane.b32.xlu0 %v26, 64
    %v45 = vpop.permute.xlu0 %44
    %v47 = vsel %vm27, %v45, 0.0
    %48 = vadd.xlane.f32.xlu0 %v47
    %v49 = vpop.xlane.xlu0 %48
    %v50 = vmax.f32 %v49, 1e-24
    %v51 = vrsqrt.pop %v50
    %v52 = vmul.f32 %v24, %v51
    %53 = vrot.lane.b32.xlu0 %v26, 32
    %v54 = vpop.permute.xlu0 %53
    %v56 = vsel %vm27, %v54, 0.0
    %57 = vadd.xlane.f32.xlu0 %v56
    %v58 = vpop.xlane.xlu0 %57
    %v59 = vmax.f32 %v58, 1e-24
    %v60 = vrsqrt.pop %v59
    %v61 = vmul.f32 %v24, %v60
    %v62 = vsel %vm27, %v33, %v43
    %vm63 = vcmask 523264
    %v64 = vsel %vm63, %v62, %v52
    %vm65 = vcmask 785408
    %v66 = vsel %vm65, %v64, %v61
    %v68 = vlaneseq
    %v69 = vshrl.u32 %v68, 7
    %v70 = vsub.s32 0, %v69
    %v71 = vrot.slane %v25, %v70
    %v73 = vmul.f32 %v66, %v71
    %74 = vst [vmem:[#allocation5] sm:$0xff] %v73
    // Predicated region
    $region14: #{tpu_custom_call.1} parent=1 // pred_check
      _
    $region15: #{tpu_custom_call.1} parent=1 // pred_check_branch
      %76 = sbr.rel (0) target = $region17
    $region16: #{tpu_custom_call.1} parent=1 // pred_region
      %s78 = ssub.s32 128, 128
      %79 = vsyncadd [#allocation4], %s78
      %s81 = sshll.u32 [#allocation5], 4
      %s82 = int_to_ptr.vmem [resolvable:$true] %s81
      %84 = dma.vmem_to_hbm [thread:$0]  %s82, 128, %s2, [#allocation4]
    $region17: #{tpu_custom_call.1} parent=1 // pred_fallthru
      _
    // Predicated region
    $region18: #{tpu_custom_call.1} parent=1 // pred_check
      _
    $region19: #{tpu_custom_call.1} parent=1 // pred_check_branch
      %86 = sbr.rel (0) target = $region21
    $region20: #{tpu_custom_call.1} parent=1 // pred_region
      %87 = dma.done [#allocation4], 128
    $region21: #{tpu_custom_call.1} parent=1 // pred_fallthru
      _
    %88 = vsyncpa [#allocation3], 1
    %89 = vsyncpa [#allocation4], 1

</llo_original>
